<compile_context>
chip_gen: v6e
topology: v6e:2x2x1
jax: 0.10.0
libtpu: 0.0.40
codegen_flags: <defaults>
</compile_context>

<pallas_src>
import jax
import jax.numpy as jnp
from jax.experimental import pallas as pl
from jax.experimental.pallas import tpu as pltpu


def _round_up(x, m):
    return ((x + m - 1) // m) * m


def _pick_tile(padded_dim, cap, align):
    """Largest multiple of `align` <= cap that divides padded_dim.

    padded_dim is guaranteed to be a multiple of `align`, so this terminates
    with at least `align`.
    """
    t = min(cap, padded_dim)
    t = max(align, (t // align) * align)
    while padded_dim % t:
        t -= align
    return t


# ---------------------------------------------------------------------------
# Small-shape fast path: one unpadded block, single MXU matmul + bias.
# ---------------------------------------------------------------------------
def _linear_single_block_kernel(x_ref, w_ref, b_ref, o_ref):
    o_ref[...] = (
        jnp.dot(x_ref[...], w_ref[...], preferred_element_type=jnp.float32)
        + b_ref[...]
    ).astype(o_ref.dtype)


# ---------------------------------------------------------------------------
# Tiled path: (M//tm, N//tn, K//tk) grid, f32 VMEM accumulator seeded with
# the bias at k==0, lane-dense write-out in the k==last epilogue.
# ---------------------------------------------------------------------------
def _linear_tiled_kernel(x_ref, w_ref, b_ref, o_ref, acc_ref):
    k = pl.program_id(2)

    @pl.when(k == 0)
    def _():
        # Seed the accumulator with the broadcast bias -> no epilogue add.
        acc_ref[...] = jnp.broadcast_to(b_ref[...], acc_ref.shape)

    # Hot loop: pure MXU accumulate in f32.
    acc_ref[...] += jnp.dot(
        x_ref[...], w_ref[...], preferred_element_type=jnp.float32
    )

    @pl.when(k == pl.num_programs(2) - 1)
    def _():
        o_ref[...] = acc_ref[...].astype(o_ref.dtype)


def linear_pallas(x, w, b, *, compute_dtype=None):
    """x: [B, In], w: [In, Out], b: [Out] -> [B, Out] (= x @ w + b)."""
    M, K = x.shape
    K2, N = w.shape
    assert K == K2, (K, K2)
    assert b.shape == (N,), b.shape

    out_dtype = x.dtype
    # Default keeps the caller dtype (exact f32 path for the test).  Pass
    # compute_dtype=jnp.bfloat16 for bf16-MXU inputs with f32 accumulation.
    cdt = jnp.dtype(compute_dtype) if compute_dtype is not None else x.dtype
    c_item = jnp.dtype(cdt).itemsize
    o_item = jnp.dtype(out_dtype).itemsize

    x_c = x.astype(cdt)
    w_c = w.astype(cdt)
    b_f32 = b.astype(jnp.float32)

    # ---- Small-shape fast path --------------------------------------------
    # Everything fits comfortably in VMEM in one step: no padding, no wrapper
    # pad/slice HBM round-trips, a single grid step.  (On v7x the second TC
    # idles here, but this regime is launch-overhead bound regardless.)
    small_bytes = (M * K + K * N) * c_item + M * N * (o_item + 4) + N * 4
    if small_bytes <= (2 << 20):
        cost = pl.CostEstimate(
            flops=2 * M * K * N,
            transcendentals=0,
            bytes_accessed=(M * K + K * N) * c_item + N * 4 + M * N * o_item,
        )
        return pl.pallas_call(
            _linear_single_block_kernel,
            out_shape=jax.ShapeDtypeStruct((M, N), out_dtype),
            grid=(1,),
            in_specs=[
                pl.BlockSpec((M, K), lambda i: (0, 0)),
                pl.BlockSpec((K, N), lambda i: (0, 0)),
                pl.BlockSpec((1, N), lambda i: (0, 0)),
            ],
            out_specs=pl.BlockSpec((M, N), lambda i: (0, 0)),
            cost_estimate=cost,
        )(x_c, w_c, b_f32.reshape(1, N))

    # ---- Tiled path ---------------------------------------------------------
    # Pad only to the lane minimum (128) on K and N.  K is zero-padded so the
    # reduction stays exact; N padding keeps output stores lane-dense.  M needs
    # no padding: the ragged last M block only produces masked output rows.
    Kp = _round_up(K, 128)
    Np = _round_up(N, 128)
    if Kp != K:
        x_c = jnp.pad(x_c, ((0, 0), (0, Kp - K)))
    if Kp != K or Np != N:
        w_c = jnp.pad(w_c, ((0, Kp - K), (0, Np - N)))
    if Np != N:
        b_f32 = jnp.pad(b_f32, (0, Np - N))
    b2 = b_f32.reshape(1, Np)

    # Tiles: 256/512-wide to feed v6e/v7x's 256-wide MXU and amortize the
    # ~0.35us/step pipeline overhead; tk/tn are divisors of the 128-padded
    # sizes so no garbage ever enters the K reduction.  f32 double-buffered
    # footprint at the caps ~4.7 MiB << 32 MiB scoped / 64 MiB v7x physical.
    tm = min(256, _round_up(M, 8))
    tk = _pick_tile(Kp, 512, 128)
    tn = _pick_tile(Np, 512, 128)

    grid = (pl.cdiv(M, tm), Np // tn, Kp // tk)
    g_m, g_n, g_k = grid

    cost = pl.CostEstimate(
        flops=2 * M * Kp * Np,
        transcendentals=0,
        bytes_accessed=(
            g_n * M * Kp * c_item       # x re-streamed once per N tile
            + g_m * Kp * Np * c_item    # w re-streamed once per M tile
            + g_m * Np * 4              # bias re-streamed once per M tile
            + M * Np * o_item           # output written once
        ),
    )

    out = pl.pallas_call(
        _linear_tiled_kernel,
        out_shape=jax.ShapeDtypeStruct((M, Np), out_dtype),
        grid_spec=pltpu.PrefetchScalarGridSpec(
            num_scalar_prefetch=0,
            grid=grid,
            in_specs=[
                pl.BlockSpec((tm, tk), lambda i, j, k: (i, k)),
                pl.BlockSpec((tk, tn), lambda i, j, k: (k, j)),
                pl.BlockSpec((1, tn), lambda i, j, k: (0, j)),
            ],
            out_specs=pl.BlockSpec((tm, tn), lambda i, j, k: (i, j)),
            scratch_shapes=[pltpu.VMEM((tm, tn), jnp.float32)],
        ),
        compiler_params=pltpu.CompilerParams(
            dimension_semantics=("parallel", "parallel", "arbitrary"),
        ),
        cost_estimate=cost,
    )(x_c, w_c, b2)

    return out[:, :N] if Np != N else out


def test_nn_forward(nn_input, hidden, params, *, compute_dtype=None):
    """Equivalent of _TestNN.forward: returns (decoder(nn_input), hidden)."""
    # TODO(synk): `forward_called` / `train_on_gpu` are Python-side bookkeeping
    # on the nn.Module with no kernel equivalent; hidden is passed through.
    out = linear_pallas(
        nn_input, params["w"], params["b"], compute_dtype=compute_dtype
    )
    return out, hidden


if __name__ == "__main__":
    key = jax.random.PRNGKey(0)

    # ---- Case 1: shapes consistent with the module (small fast path) -------
    batch = 8
    input_size = 32
    output_size = 16

    k_x, k_h, k_w, k_b, k_x2, k_w2, k_b2 = jax.random.split(key, 7)

    nn_input = jax.random.normal(k_x, (batch, input_size), dtype=jnp.float32)
    hidden = jax.random.normal(k_h, (1, batch, input_size), dtype=jnp.float32)

    bound = 1.0 / (input_size ** 0.5)
    w = jax.random.uniform(
        k_w, (input_size, output_size), dtype=jnp.float32,
        minval=-bound, maxval=bound)
    b = jax.random.uniform(
        k_b, (output_size,), dtype=jnp.float32, minval=-bound, maxval=bound)
    params = {"w": w, "b": b}

    out, hid = test_nn_forward(nn_input, hidden, params)
    jax.block_until_ready((out, hid))

    ref = nn_input @ w + b
    assert out.shape == (batch, output_size)
    assert jnp.allclose(out, ref, atol=1e-5, rtol=1e-5)
    assert jnp.array_equal(hid, hidden)

    # ---- Case 2: larger / ragged shapes to exercise the tiled path ---------
    M2, K2, N2 = 1000, 300, 200   # ragged M, K->384, N->256 pad, multi M-tiles
    x2 = jax.random.normal(k_x2, (M2, K2), dtype=jnp.float32)
    bound2 = 1.0 / (K2 ** 0.5)
    w2 = jax.random.uniform(k_w2, (K2, N2), dtype=jnp.float32,
                            minval=-bound2, maxval=bound2)
    b2 = jax.random.uniform(k_b2, (N2,), dtype=jnp.float32,
                            minval=-bound2, maxval=bound2)
    out2 = linear_pallas(x2, w2, b2)
    jax.block_until_ready(out2)
    ref2 = jnp.dot(x2, w2, precision=jax.lax.Precision.HIGHEST) + b2
    assert out2.shape == (M2, N2)
    assert jnp.allclose(out2, ref2, atol=5e-4, rtol=5e-4)

    print("KERNEL_OK")
</pallas_src>

<mosaic_0001>
module attributes {stable_mosaic.version = 11 : i64} {
  func.func @_linear_single_block_kernel(%arg0: i32, %arg1: memref<8x32xf32, #tpu.memory_space<vmem>>, %arg2: memref<32x16xf32, #tpu.memory_space<vmem>>, %arg3: memref<1x16xf32, #tpu.memory_space<vmem>>, %arg4: memref<8x16xf32, #tpu.memory_space<vmem>>) attributes {dimension_semantics = [#tpu.dimension_semantics<arbitrary>], iteration_bounds = array<i64: 1>, scalar_prefetch = 0 : i64, scratch_operands = 0 : i64, tpu.core_type = #tpu.core_type<tc>, window_params = [{pipeline_mode = #tpu.pipeline_mode<synchronous>, transform_indices = @transform_0, window_bounds = array<i64: 8, 32>}, {pipeline_mode = #tpu.pipeline_mode<synchronous>, transform_indices = @transform_1, window_bounds = array<i64: 32, 16>}, {pipeline_mode = #tpu.pipeline_mode<synchronous>, transform_indices = @transform_2, window_bounds = array<i64: 1, 16>}, {pipeline_mode = #tpu.pipeline_mode<synchronous>, transform_indices = @transform_3, window_bounds = array<i64: 8, 16>}]} {
    %c0 = arith.constant 0 : index
    %c0_0 = arith.constant 0 : index
    %0 = vector.load %arg1[%c0, %c0_0] : memref<8x32xf32, #tpu.memory_space<vmem>>, vector<8x32xf32>
    %c0_1 = arith.constant 0 : index
    %c0_2 = arith.constant 0 : index
    %1 = vector.load %arg2[%c0_1, %c0_2] : memref<32x16xf32, #tpu.memory_space<vmem>>, vector<32x16xf32>
    %cst = arith.constant dense<0.000000e+00> : vector<8x16xf32>
    %2 = tpu.matmul %0, %1, %cst {dimension_numbers = #tpu.dot_dimension_numbers<[1], [0], [0], [1], [0, 0, 1, 1], [], []>} : vector<8x32xf32>, vector<32x16xf32>, vector<8x16xf32> -> vector<8x16xf32>
    %c0_3 = arith.constant 0 : index
    %c0_4 = arith.constant 0 : index
    %3 = vector.load %arg3[%c0_3, %c0_4] : memref<1x16xf32, #tpu.memory_space<vmem>>, vector<1x16xf32>
    %4 = vector.broadcast %3 : vector<1x16xf32> to vector<8x16xf32>
    %5 = arith.addf %2, %4 : vector<8x16xf32>
    %c0_5 = arith.constant 0 : index
    %c0_6 = arith.constant 0 : index
    %6 = vector.load %arg4[%c0_5, %c0_6] : memref<8x16xf32, #tpu.memory_space<vmem>>, vector<8x16xf32>
    tpu.vector_store %arg4[%c0_5, %c0_6], %5 {strides = array<i32>} : memref<8x16xf32, #tpu.memory_space<vmem>>, vector<8x16xf32>,
    return
  }
  func.func @transform_0(%arg0: i32) -> (i32, i32) {
    %c0_i32 = arith.constant 0 : i32
    %c0_i32_0 = arith.constant 0 : i32
    %c0_i32_1 = arith.constant 0 : i32
    return %c0_i32, %c0_i32_0 : i32, i32
  }
  func.func @transform_1(%arg0: i32) -> (i32, i32) {
    %c0_i32 = arith.constant 0 : i32
    %c0_i32_0 = arith.constant 0 : i32
    %c0_i32_1 = arith.constant 0 : i32
    return %c0_i32, %c0_i32_0 : i32, i32
  }
  func.func @transform_2(%arg0: i32) -> (i32, i32) {
    %c0_i32 = arith.constant 0 : i32
    %c0_i32_0 = arith.constant 0 : i32
    %c0_i32_1 = arith.constant 0 : i32
    return %c0_i32, %c0_i32_0 : i32, i32
  }
  func.func @transform_3(%arg0: i32) -> (i32, i32) {
    %c0_i32 = arith.constant 0 : i32
    %c0_i32_0 = arith.constant 0 : i32
    %c0_i32_1 = arith.constant 0 : i32
    return %c0_i32, %c0_i32_0 : i32, i32
  }
}

</mosaic_0001>

<llo_original>
// kernel: tpu_custom_call.1
$region0: #{tpu_custom_call.1}
  #allocation0 [shape = 'u32[]', space=smem, size = 0x4, offset = 0x4, fixed_abs, tag = 'smem constant byte address 0x4 - core index']
  #allocation1 [shape = 'u32[144,128]{1,0:T(1,128)}', space=vmem, size = 0x12000, scoped, tag = 'internal scratch']
  %s0 = inlined_call_operand.vmem [shape: f32[8,32], index: 0, kind: input, shape index: {}]
  %s1 = inlined_call_operand.vmem [shape: f32[32,16], index: 1, kind: input, shape index: {}]
  %s2 = inlined_call_operand.vmem [shape: f32[1,16], index: 2, kind: input, shape index: {}]
  %s3 = inlined_call_operand.hbm [shape: f32[8,16], index: 3, kind: output, shape index: {}]
  %s4 = sld [smem:[#allocation0]]
  $region22: #{tpu_custom_call.1} parent=0
    _
  %s6 = ssub.s32 1, %s4
  %s7 = scalar_select 0, %s6, %s4
  $region1: #{tpu_custom_call.1} parent=0
    #allocation2 [shape = 'u8[4096]{0}', space=vmem, size = 0x1000, scoped, tag = 'output window, operand 0, single buffered']
    #allocation3 [shape = 's32[1]{0}', space=sflag, size = 0x4, scoped, tag = 'scoped memory for tpu_custom_call.1']
    %8 = vsyncpa [#allocation3], 0
    // Predicated region
    $region2: #{tpu_custom_call.1} parent=1 // pred_check
      _
    $region3: #{tpu_custom_call.1} parent=1 // pred_check_branch
      %10 = sbr.rel (0) target = $region5
    $region4: #{tpu_custom_call.1} parent=1 // pred_region
      _
    $region5: #{tpu_custom_call.1} parent=1 // pred_fallthru
      _
    // Predicated region
    $region6: #{tpu_custom_call.1} parent=1 // pred_check
      _
    $region7: #{tpu_custom_call.1} parent=1 // pred_check_branch
      %12 = sbr.rel (0) target = $region9
    $region8: #{tpu_custom_call.1} parent=1 // pred_region
      _
    $region9: #{tpu_custom_call.1} parent=1 // pred_fallthru
      _
    // Predicated region
    $region10: #{tpu_custom_call.1} parent=1 // pred_check
      _
    $region11: #{tpu_custom_call.1} parent=1 // pred_check_branch
      %14 = sbr.rel (0) target = $region13
    $region12: #{tpu_custom_call.1} parent=1 // pred_region
      _
    $region13: #{tpu_custom_call.1} parent=1 // pred_fallthru
      _
    %v15 = vld [vmem:[%s0] sm:$0xff]
    %v16 = vld [vmem:[%s1] sm:$0xff]
    %v17 = vld [vmem:[%s1 + $0x8] sm:$0xff]
    %v18 = vld [vmem:[%s1 + $0x10] sm:$0xff]
    %v19 = vld [vmem:[%s1 + $0x18] sm:$0xff]
    %v20 = vld [vmem:[%s2] sm:$0x1]
    %v22 = vlaneseq
    %v23 = vshrl.u32 %v22, 7
    %v24 = vsub.s32 0, %v23
    %v25 = vrot.slane %v20, %v24
    %vm27 = vcmask 261120
    %v29 = vsel %vm27, %v15, 0
    %31 = vmatprep.subr.mxu0 0.0
    %32 = vmatpush1.msra.mxu0 0.0
    %33 = vmatprep.subr.mxu0 0.0
    %34 = vmatpush1.msra.mxu0 0.0
    %35 = vmatprep.subr.mxu0 0.0
    %36 = vmatpush1.msra.mxu0 0.0
    %37 = vmatprep.subr.mxu0 0.0
    %38 = vmatpush1.msra.mxu0 0.0
    %39 = vmatprep.subr.mxu0 0.0
    %40 = vmatpush1.msra.mxu0 0.0
    %41 = vmatprep.subr.mxu0 0.0
    %42 = vmatpush1.msra.mxu0 0.0
    %43 = vmatprep.subr.mxu0 0.0
    %44 = vmatpush1.msra.mxu0 0.0
    %45 = vmatprep.subr.mxu0 0.0
    %46 = vmatpush1.msra.mxu0 0.0
    %47 = vmatprep.subr.mxu0 0.0
    %48 = vmatpush1.msra.mxu0 0.0
    %49 = vmatprep.subr.mxu0 0.0
    %50 = vmatpush1.msra.mxu0 0.0
    %51 = vmatprep.subr.mxu0 0.0
    %52 = vmatpush1.msra.mxu0 0.0
    %53 = vmatprep.subr.mxu0 0.0
    %54 = vmatpush1.msra.mxu0 0.0
    %55 = vmatprep.subr.mxu0 0.0
    %56 = vmatpush1.msra.mxu0 %v19
    %57 = vmatprep.subr.mxu0 0.0
    %58 = vmatpush1.msra.mxu0 %v18
    %59 = vmatprep.subr.mxu0 0.0
    %60 = vmatpush1.msra.mxu0 %v17
    %61 = vmatprep.subr.mxu0 0.0
    %62 = vmatpush1.msra.mxu0 %v16
    %63 = vmatprep.subr.mxu0 0.0
    %64 = vmatpush2.msra.mxu0 0.0
    %65 = vmatprep.subr.mxu0 0.0
    %66 = vmatpush2.msra.mxu0 0.0
    %67 = vmatprep.subr.mxu0 0.0
    %68 = vmatpush2.msra.mxu0 0.0
    %69 = vmatprep.subr.mxu0 0.0
    %70 = vmatpush2.msra.mxu0 0.0
    %71 = vmatprep.subr.mxu0 0.0
    %72 = vmatpush2.msra.mxu0 0.0
    %73 = vmatprep.subr.mxu0 0.0
    %74 = vmatpush2.msra.mxu0 0.0
    %75 = vmatprep.subr.mxu0 0.0
    %76 = vmatpush2.msra.mxu0 0.0
    %77 = vmatprep.subr.mxu0 0.0
    %78 = vmatpush2.msra.mxu0 0.0
    %79 = vmatprep.subr.mxu0 0.0
    %80 = vmatpush2.msra.mxu0 0.0
    %81 = vmatprep.subr.mxu0 0.0
    %82 = vmatpush2.msra.mxu0 0.0
    %83 = vmatprep.subr.mxu0 0.0
    %84 = vmatpush2.msra.mxu0 0.0
    %85 = vmatprep.subr.mxu0 0.0
    %86 = vmatpush2.msra.mxu0 0.0
    %87 = vmatprep.subr.mxu0 0.0
    %88 = vmatpush2.msra.mxu0 0.0
    %89 = vmatprep.subr.mxu0 0.0
    %90 = vmatpush2.msra.mxu0 0.0
    %91 = vmatprep.subr.mxu0 0.0
    %92 = vmatpush2.msra.mxu0 0.0
    %93 = vmatprep.subr.mxu0 0.0
    %94 = vmatpush2.msra.mxu0 0.0
    %95 = vmatprep.mubr.f32.mxu0 0.0
    %96 = vmatmul.mubr.f32.gmra.mxu0 %v29
    %v97 = vpop.f32.mrf.mxu0
    %v98 = vadd.f32 %v25, %v97
    %v99 = vpop.f32.mrf.mxu0
    %100 = vdwg.mxu0
    %vm101 = vcmask 130048
    %102 = vst.msk [vmem:[#allocation2] sm:$0xff] %vm101, %v98
    // Predicated region
    $region14: #{tpu_custom_call.1} parent=1 // pred_check
      _
    $region15: #{tpu_custom_call.1} parent=1 // pred_check_branch
      %104 = sbr.rel (0) target = $region17
    $region16: #{tpu_custom_call.1} parent=1 // pred_region
      %s106 = ssub.s32 128, 128
      %107 = vsyncadd [#allocation3], %s106
      %s109 = sshll.u32 [#allocation2], 4
      %s110 = int_to_ptr.vmem [resolvable:$true] %s109
      %112 = dma.vmem_to_hbm [thread:$0]  %s110, 128, %s3, [#allocation3]
    $region17: #{tpu_custom_call.1} parent=1 // pred_fallthru
      _
    // Predicated region
    $region18: #{tpu_custom_call.1} parent=1 // pred_check
      _
    $region19: #{tpu_custom_call.1} parent=1 // pred_check_branch
      %114 = sbr.rel (0) target = $region21
    $region20: #{tpu_custom_call.1} parent=1 // pred_region
      %115 = dma.done [#allocation3], 128
    $region21: #{tpu_custom_call.1} parent=1 // pred_fallthru
      _
    %116 = vsyncpa [#allocation3], 1

</llo_original>
